<compile_context>
chip_gen: v6e
topology: v6e:2x2x1
jax: 0.10.0
libtpu: 0.0.40
codegen_flags: <defaults>
</compile_context>

<pallas_src>
import jax
import jax.numpy as jnp
from jax.experimental import pallas as pl
from jax.experimental.pallas import tpu as pltpu


VMEM_LIMIT_BYTES = 48 * 1024 * 1024  # < 64 MiB physical on v7x; fine on v5e/v6e.


def _round_up(x, m):
    return (x + m - 1) // m * m


# ---------------------------------------------------------------------------
# Kernel: one row-tile of the fully folded PatchEmbed forward.
# ---------------------------------------------------------------------------
def patch_embed_kernel(p_ref, w_ref, b_ref, out_ref):
    """p_ref: (tm, K_pad) bf16 patches; w_ref: (K_pad, E_pad) bf16 folded
    weight; b_ref: (1, E_pad) f32 folded bias; out_ref: (tm, E_pad)."""
    acc = jnp.dot(p_ref[...], w_ref[...], preferred_element_type=jnp.float32)
    out_ref[...] = (acc + b_ref[...]).astype(out_ref.dtype)


# ---------------------------------------------------------------------------
# Wrapper
# ---------------------------------------------------------------------------
def _patchify(x, ph, pw):
    """(B, T, C, H, W) -> (B*T*Hp*Wp, C*ph*pw), features in (c, kh, kw) order
    so they match Conv2d weight.reshape(out_ch, -1)."""
    B, T, C, H, W = x.shape
    Hp, Wp = H // ph, W // pw
    x = x.reshape(B, T, C, Hp, ph, Wp, pw)
    x = x.transpose(0, 1, 3, 5, 2, 4, 6)          # (B, T, Hp, Wp, C, ph, pw)
    return x.reshape(B * T * Hp * Wp, C * ph * pw), Hp * Wp


def _pick_tile_m(M, K_pad, E_pad, *, vmem_budget_bytes, target=1024):
    """Largest row tile (multiple of 8, <= target) whose double-buffered
    bf16 input + f32 output tiles fit the VMEM budget alongside the weights."""
    bytes_per_row = 2 * (K_pad * 2 + E_pad * 4)          # 2 bufs, bf16 in, f32 out
    resident = 2 * (K_pad * E_pad * 2 + E_pad * 4)       # weight + bias buffers
    budget = max(vmem_budget_bytes - resident, 8 * bytes_per_row)
    tm = min(target, budget // bytes_per_row)
    tm = max(8, (tm // 8) * 8)
    return min(tm, _round_up(M, 8))


def patch_embed(data, forcing, kernel_params, patch_size, embed_dim, tile_m=1024):
    ph, pw = patch_size
    B, T, Cd, H, W = data.shape
    Cf = forcing.shape[2]
    assert H % ph == 0 and W % pw == 0, "resolution must be divisible by patch size"

    w_comb, b_comb = kernel_params
    K_pad, E_pad = w_comb.shape
    K = (Cd + Cf) * ph * pw

    pd, N = _patchify(data, ph, pw)
    pf, _ = _patchify(forcing, ph, pw)
    M = pd.shape[0]                                # B*T*num_patches rows

    tm = _pick_tile_m(M, K_pad, E_pad,
                      vmem_budget_bytes=VMEM_LIMIT_BYTES - (8 << 20),
                      target=tile_m)
    Mp = _round_up(M, tm)

    # Single concatenated, K-padded, bf16 patch matrix (one lane-dense stream).
    patches = jnp.concatenate([pd, pf], axis=1)
    patches = jnp.pad(patches, ((0, Mp - M), (0, K_pad - K)))
    patches = patches.astype(jnp.bfloat16)
    # TODO(synk): for very large inputs, move patch extraction into the kernel
    # (grid over (B*T, Hp) with in-kernel reshape) to avoid materializing
    # the intermediate (M, K) patch matrix in HBM.

    out = pl.pallas_call(
        patch_embed_kernel,
        out_shape=jax.ShapeDtypeStruct((Mp, E_pad), data.dtype),
        grid=(Mp // tm,),
        in_specs=[
            pl.BlockSpec((tm, K_pad), lambda i: (i, 0)),
            pl.BlockSpec((K_pad, E_pad), lambda i: (0, 0)),
            pl.BlockSpec((1, E_pad), lambda i: (0, 0)),
        ],
        out_specs=pl.BlockSpec((tm, E_pad), lambda i: (i, 0)),
        compiler_params=pltpu.CompilerParams(
            dimension_semantics=("parallel",),
            vmem_limit_bytes=VMEM_LIMIT_BYTES,
            allow_input_fusion=[True, False, False],
        ),
    )(patches, w_comb, b_comb)

    return out[:M, :embed_dim].reshape(B, T, N, embed_dim)


# ---------------------------------------------------------------------------
# Parameters (torch layout) + conversion to folded kernel layout
# ---------------------------------------------------------------------------
def make_torch_params(key, data_channels, forcing_channels, patch_size, embed_dim):
    ph, pw = patch_size
    e2 = embed_dim // 2
    ks = iter(jax.random.split(key, 8))

    def nrm(shape, scale):
        return (scale * jax.random.normal(next(ks), shape)).astype(jnp.float32)

    w_data = nrm((e2, data_channels, ph, pw), 1.0 / (data_channels * ph * pw) ** 0.5)
    b_data = nrm((e2,), 0.02)
    w_forc = nrm((e2, forcing_channels, ph, pw), 1.0 / (forcing_channels * ph * pw) ** 0.5)
    b_forc = nrm((e2,), 0.02)
    w_fus = nrm((embed_dim, embed_dim), 1.0 / embed_dim ** 0.5)
    b_fus = nrm((embed_dim,), 0.02)
    return [w_data, b_data, w_forc, b_forc, w_fus, b_fus]


def to_kernel_params(torch_params):
    """Fold conv-as-matmul weights + concat + fusion Linear into one
    (K_pad, E_pad) bf16 weight and one (1, E_pad) f32 bias."""
    w_data, b_data, w_forc, b_forc, w_fus, b_fus = torch_params
    e2 = w_data.shape[0]
    E = w_fus.shape[0]
    assert 2 * e2 == E

    wd = w_data.reshape(e2, -1).T                  # (Kd, E/2)
    wf = w_forc.reshape(e2, -1).T                  # (Kf, E/2)
    Kd, Kf = wd.shape[0], wf.shape[0]
    wfu_t = w_fus.T                                # (E, E): x @ W.T
    wfu_d, wfu_f = wfu_t[:e2, :], wfu_t[e2:, :]

    w_comb = jnp.concatenate([wd @ wfu_d, wf @ wfu_f], axis=0)   # (Kd+Kf, E) f32
    b_comb = b_data @ wfu_d + b_forc @ wfu_f + b_fus             # (E,) f32

    K_pad = _round_up(Kd + Kf, 128)
    E_pad = _round_up(E, 128)
    w_comb = jnp.pad(w_comb, ((0, K_pad - (Kd + Kf)), (0, E_pad - E)))
    b_comb = jnp.pad(b_comb, (0, E_pad - E))
    return (w_comb.astype(jnp.bfloat16),
            b_comb.reshape(1, E_pad).astype(jnp.float32))


# ---------------------------------------------------------------------------
# Pure-JAX reference (mirrors the PyTorch forward with real convolutions, f32)
# ---------------------------------------------------------------------------
def reference_forward(data, forcing, torch_params, patch_size):
    w_data, b_data, w_forc, b_forc, w_fus, b_fus = torch_params
    ph, pw = patch_size
    B, T, Cd, H, W = data.shape
    Cf = forcing.shape[2]
    e2 = w_data.shape[0]

    def conv(x, w, b):
        y = jax.lax.conv_general_dilated(
            x, w, window_strides=(ph, pw), padding="VALID",
            dimension_numbers=("NCHW", "OIHW", "NCHW"))
        return y + b.reshape(1, -1, 1, 1)

    de = conv(data.reshape(B * T, Cd, H, W), w_data, b_data)    # (BT, E/2, Hp, Wp)
    fe = conv(forcing.reshape(B * T, Cf, H, W), w_forc, b_forc)
    BT, _, Hp, Wp = de.shape
    de = de.reshape(BT, e2, Hp * Wp).transpose(0, 2, 1)
    fe = fe.reshape(BT, e2, Hp * Wp).transpose(0, 2, 1)
    comb = jnp.concatenate([de, fe], axis=2)                     # (BT, N, E)
    out = comb @ w_fus.T + b_fus
    return out.reshape(B, T, Hp * Wp, -1)


# ---------------------------------------------------------------------------
if __name__ == "__main__":
    B, T = 2, 2
    Cd, Cf = 4, 3
    H = W = 16
    patch = (4, 4)
    E = 64

    key = jax.random.PRNGKey(0)
    kd, kf, kp = jax.random.split(key, 3)
    data = jax.random.normal(kd, (B, T, Cd, H, W), jnp.float32)
    forcing = jax.random.normal(kf, (B, T, Cf, H, W), jnp.float32)

    torch_params = make_torch_params(kp, Cd, Cf, patch, E)
    kparams = to_kernel_params(torch_params)

    out = patch_embed(data, forcing, kparams, patch, E)
    out = jax.block_until_ready(out)

    N = (H // patch[0]) * (W // patch[1])
    assert out.shape == (B, T, N, E) and out.dtype == jnp.float32

    ref = reference_forward(data, forcing, torch_params, patch)
    max_err = float(jnp.max(jnp.abs(out - ref)))
    # bf16 matmul operands: expect ~1e-2-scale deviation vs the f32 reference.
    assert max_err < 5e-2, f"mismatch vs reference: {max_err}"

    print("KERNEL_OK")
</pallas_src>

<mosaic_0001>
module attributes {stable_mosaic.version = 11 : i64} {
  func.func @patch_embed_kernel(%arg0: i32, %arg1: memref<64x128xbf16, #tpu.memory_space<vmem>>, %arg2: memref<128x128xbf16, #tpu.memory_space<vmem>>, %arg3: memref<1x128xf32, #tpu.memory_space<vmem>>, %arg4: memref<64x128xf32, #tpu.memory_space<vmem>>) attributes {dimension_semantics = [#tpu.dimension_semantics<parallel>], iteration_bounds = array<i64: 1>, scalar_prefetch = 0 : i64, scratch_operands = 0 : i64, tpu.core_type = #tpu.core_type<tc>, window_params = [{transform_indices = @transform_0, window_bounds = array<i64: 64, 128>}, {pipeline_mode = #tpu.pipeline_mode<synchronous>, transform_indices = @transform_1, window_bounds = array<i64: 128, 128>}, {pipeline_mode = #tpu.pipeline_mode<synchronous>, transform_indices = @transform_2, window_bounds = array<i64: 1, 128>}, {transform_indices = @transform_3, window_bounds = array<i64: 64, 128>}]} {
    %c0 = arith.constant 0 : index
    %c0_0 = arith.constant 0 : index
    %0 = vector.load %arg1[%c0, %c0_0] : memref<64x128xbf16, #tpu.memory_space<vmem>>, vector<64x128xbf16>
    %c0_1 = arith.constant 0 : index
    %c0_2 = arith.constant 0 : index
    %1 = vector.load %arg2[%c0_1, %c0_2] : memref<128x128xbf16, #tpu.memory_space<vmem>>, vector<128x128xbf16>
    %cst = arith.constant dense<0.000000e+00> : vector<64x128xf32>
    %2 = tpu.matmul %0, %1, %cst {dimension_numbers = #tpu.dot_dimension_numbers<[1], [0], [0], [1], [0, 0, 1, 1], [], []>} : vector<64x128xbf16>, vector<128x128xbf16>, vector<64x128xf32> -> vector<64x128xf32>
    %c0_3 = arith.constant 0 : index
    %c0_4 = arith.constant 0 : index
    %3 = vector.load %arg3[%c0_3, %c0_4] : memref<1x128xf32, #tpu.memory_space<vmem>>, vector<1x128xf32>
    %4 = vector.broadcast %3 : vector<1x128xf32> to vector<64x128xf32>
    %5 = arith.addf %2, %4 : vector<64x128xf32>
    %c0_5 = arith.constant 0 : index
    %c0_6 = arith.constant 0 : index
    %6 = vector.load %arg4[%c0_5, %c0_6] : memref<64x128xf32, #tpu.memory_space<vmem>>, vector<64x128xf32>
    tpu.vector_store %arg4[%c0_5, %c0_6], %5 {strides = array<i32>} : memref<64x128xf32, #tpu.memory_space<vmem>>, vector<64x128xf32>,
    return
  }
  func.func @transform_0(%arg0: i32) -> (i32, i32) {
    %c0_i32 = arith.constant 0 : i32
    %c0_i32_0 = arith.constant 0 : i32
    return %arg0, %c0_i32 : i32, i32
  }
  func.func @transform_1(%arg0: i32) -> (i32, i32) {
    %c0_i32 = arith.constant 0 : i32
    %c0_i32_0 = arith.constant 0 : i32
    %c0_i32_1 = arith.constant 0 : i32
    return %c0_i32, %c0_i32_0 : i32, i32
  }
  func.func @transform_2(%arg0: i32) -> (i32, i32) {
    %c0_i32 = arith.constant 0 : i32
    %c0_i32_0 = arith.constant 0 : i32
    %c0_i32_1 = arith.constant 0 : i32
    return %c0_i32, %c0_i32_0 : i32, i32
  }
  func.func @transform_3(%arg0: i32) -> (i32, i32) {
    %c0_i32 = arith.constant 0 : i32
    %c0_i32_0 = arith.constant 0 : i32
    return %arg0, %c0_i32 : i32, i32
  }
}

</mosaic_0001>

<llo_original>
// kernel: tpu_custom_call.1
$region0: #{tpu_custom_call.1}
  #allocation0 [shape = 'u32[]', space=smem, size = 0x4, offset = 0x4, fixed_abs, tag = 'smem constant byte address 0x4 - core index']
  #allocation1 [shape = 'u32[144,128]{1,0:T(1,128)}', space=vmem, size = 0x12000, scoped, tag = 'internal scratch']
  %s0 = inlined_call_operand.hbm [shape: bf16[64,128], index: 0, kind: input, shape index: {}]
  %s1 = inlined_call_operand.hbm [shape: bf16[128,128], index: 1, kind: input, shape index: {}]
  %s2 = inlined_call_operand.vmem [shape: f32[1,128], index: 2, kind: input, shape index: {}]
  %s3 = inlined_call_operand.hbm [shape: f32[64,128], index: 3, kind: output, shape index: {}]
  %s4 = sld [smem:[#allocation0]]
  $region30: #{tpu_custom_call.1} parent=0
    _
  %s6 = ssub.s32 1, %s4
  %s7 = scalar_select 0, %s6, %s4
  $region1: #{tpu_custom_call.1} parent=0
    #allocation2 [shape = 'u8[16384]{0}', space=vmem, size = 0x4000, scoped, tag = 'input window, operand 0, single buffered']
    #allocation3 [shape = 's32[1]{0}', space=sflag, size = 0x4, scoped, tag = 'scoped memory for tpu_custom_call.1']
    #allocation4 [shape = 's32[1]{0}', space=sflag, size = 0x4, scoped, tag = 'scoped memory for tpu_custom_call.1']
    #allocation5 [shape = 'u8[32768]{0}', space=vmem, size = 0x8000, scoped, tag = 'input window, operand 1, single buffered']
    #allocation6 [shape = 's32[1]{0}', space=sflag, size = 0x4, scoped, tag = 'scoped memory for tpu_custom_call.1']
    #allocation7 [shape = 'u8[32768]{0}', space=vmem, size = 0x8000, scoped, tag = 'output window, operand 0, single buffered']
    %8 = vsyncpa [#allocation3], 0
    %9 = vsyncpa [#allocation6], 0
    %10 = vsyncpa [#allocation4], 0
    // Predicated region
    $region2: #{tpu_custom_call.1} parent=1 // pred_check
      _
    $region3: #{tpu_custom_call.1} parent=1 // pred_check_branch
      %12 = sbr.rel (0) target = $region5
    $region4: #{tpu_custom_call.1} parent=1 // pred_region
      %s14 = ssub.s32 512, 512
      %15 = vsyncadd [#allocation3], %s14
      %s16 = sshll.u32 [#allocation2], 4
      %s17 = int_to_ptr.vmem [resolvable:$true] %s16
      %22 = dma.hbm_to_vmem [thread:$0]  %s0, 512, %s17, [#allocation3], 64, 64, 4
    $region5: #{tpu_custom_call.1} parent=1 // pred_fallthru
      _
    // Predicated region
    $region6: #{tpu_custom_call.1} parent=1 // pred_check
      _
    $region7: #{tpu_custom_call.1} parent=1 // pred_check_branch
      %24 = sbr.rel (0) target = $region9
    $region8: #{tpu_custom_call.1} parent=1 // pred_region
      %s26 = ssub.s32 1024, 1024
      %27 = vsyncadd [#allocation6], %s26
      %s28 = sshll.u32 [#allocation5], 4
      %s29 = int_to_ptr.vmem [resolvable:$true] %s28
      %34 = dma.hbm_to_vmem [thread:$0]  %s1, 1024, %s29, [#allocation6], 64, 64, 4
    $region9: #{tpu_custom_call.1} parent=1 // pred_fallthru
      _
    // Predicated region
    $region10: #{tpu_custom_call.1} parent=1 // pred_check
      _
    $region11: #{tpu_custom_call.1} parent=1 // pred_check_branch
      %36 = sbr.rel (0) target = $region13
    $region12: #{tpu_custom_call.1} parent=1 // pred_region
      _
    $region13: #{tpu_custom_call.1} parent=1 // pred_fallthru
      _
    // Predicated region
    $region14: #{tpu_custom_call.1} parent=1 // pred_check
      _
    $region15: #{tpu_custom_call.1} parent=1 // pred_check_branch
      %38 = sbr.rel (0) target = $region17
    $region16: #{tpu_custom_call.1} parent=1 // pred_region
      %39 = dma.done [#allocation3], 512
    $region17: #{tpu_custom_call.1} parent=1 // pred_fallthru
      _
    // Predicated region
    $region18: #{tpu_custom_call.1} parent=1 // pred_check
      _
    $region19: #{tpu_custom_call.1} parent=1 // pred_check_branch
      %41 = sbr.rel (0) target = $region21
    $region20: #{tpu_custom_call.1} parent=1 // pred_region
      %42 = dma.done [#allocation6], 1024
    $region21: #{tpu_custom_call.1} parent=1 // pred_fallthru
      _
    %v44 = vld [vmem:[#allocation2] sm:$0xf]
    %v45 = vld [vmem:[#allocation2 + $0x4] sm:$0xf]
    %v46 = vld [vmem:[#allocation2 + $0x8] sm:$0xf]
    %v47 = vld [vmem:[#allocation2 + $0xc] sm:$0xf]
    %v48 = vld [vmem:[#allocation2 + $0x10] sm:$0xf]
    %v49 = vld [vmem:[#allocation2 + $0x14] sm:$0xf]
    %v50 = vld [vmem:[#allocation2 + $0x18] sm:$0xf]
    %v51 = vld [vmem:[#allocation2 + $0x1c] sm:$0xf]
    %v52 = vld [vmem:[#allocation5] sm:$0xf]
    %v53 = vld [vmem:[#allocation5 + $0x4] sm:$0xf]
    %v54 = vld [vmem:[#allocation5 + $0x8] sm:$0xf]
    %v55 = vld [vmem:[#allocation5 + $0xc] sm:$0xf]
    %v56 = vld [vmem:[#allocation5 + $0x10] sm:$0xf]
    %v57 = vld [vmem:[#allocation5 + $0x14] sm:$0xf]
    %v58 = vld [vmem:[#allocation5 + $0x18] sm:$0xf]
    %v59 = vld [vmem:[#allocation5 + $0x1c] sm:$0xf]
    %v60 = vld [vmem:[#allocation5 + $0x20] sm:$0xf]
    %v61 = vld [vmem:[#allocation5 + $0x24] sm:$0xf]
    %v62 = vld [vmem:[#allocation5 + $0x28] sm:$0xf]
    %v63 = vld [vmem:[#allocation5 + $0x2c] sm:$0xf]
    %v64 = vld [vmem:[#allocation5 + $0x30] sm:$0xf]
    %v65 = vld [vmem:[#allocation5 + $0x34] sm:$0xf]
    %v66 = vld [vmem:[#allocation5 + $0x38] sm:$0xf]
    %v67 = vld [vmem:[#allocation5 + $0x3c] sm:$0xf]
    %v68 = vld [vmem:[%s2] sm:$0x1]
    %v70 = vlaneseq
    %v71 = vshrl.u32 %v70, 7
    %v72 = vsub.s32 0, %v71
    %v73 = vrot.slane %v68, %v72
    %v83 = vunpack.c.l.b16 %v44
    %v84 = vunpack.c.l.b16 %v45
    %v85 = vunpack.c.l.b16 %v46
    %v86 = vunpack.c.l.b16 %v47
    %v87 = vunpack.c.l.b16 %v48
    %v88 = vunpack.c.l.b16 %v49
    %v89 = vunpack.c.l.b16 %v50
    %v90 = vunpack.c.l.b16 %v51
    %v91 = vpack.c.b16 %v84, %v83
    %v92 = vpack.c.b16 %v86, %v85
    %v93 = vpack.c.b16 %v88, %v87
    %v94 = vpack.c.b16 %v90, %v89
    %v115 = vunpack.c.l.b16 %v52
    %v116 = vunpack.c.l.b16 %v53
    %v117 = vunpack.c.l.b16 %v54
    %v118 = vunpack.c.l.b16 %v55
    %v119 = vunpack.c.l.b16 %v56
    %v120 = vunpack.c.l.b16 %v57
    %v121 = vunpack.c.l.b16 %v58
    %v122 = vunpack.c.l.b16 %v59
    %v123 = vunpack.c.l.b16 %v60
    %v124 = vunpack.c.l.b16 %v61
    %v125 = vunpack.c.l.b16 %v62
    %v126 = vunpack.c.l.b16 %v63
    %v127 = vunpack.c.l.b16 %v64
    %v128 = vunpack.c.l.b16 %v65
    %v129 = vunpack.c.l.b16 %v66
    %v130 = vunpack.c.l.b16 %v67
    %v131 = vpack.c.b16 %v116, %v115
    %v132 = vpack.c.b16 %v118, %v117
    %v133 = vpack.c.b16 %v120, %v119
    %v134 = vpack.c.b16 %v122, %v121
    %v135 = vpack.c.b16 %v124, %v123
    %v136 = vpack.c.b16 %v126, %v125
    %v137 = vpack.c.b16 %v128, %v127
    %v138 = vpack.c.b16 %v130, %v129
    %147 = vmatprep.subr.bf16.mxu0 0
    %148 = vmatpush1.bf16.msra.mxu0 %v138
    %149 = vmatprep.subr.bf16.mxu0 0
    %150 = vmatpush1.bf16.msra.mxu0 %v137
    %151 = vmatprep.subr.bf16.mxu0 0
    %152 = vmatpush1.bf16.msra.mxu0 %v136
    %153 = vmatprep.subr.bf16.mxu0 0
    %154 = vmatpush1.bf16.msra.mxu0 %v135
    %155 = vmatprep.subr.bf16.mxu0 0
    %156 = vmatpush1.bf16.msra.mxu0 %v134
    %157 = vmatprep.subr.bf16.mxu0 0
    %158 = vmatpush1.bf16.msra.mxu0 %v133
    %159 = vmatprep.subr.bf16.mxu0 0
    %160 = vmatpush1.bf16.msra.mxu0 %v132
    %161 = vmatprep.subr.bf16.mxu0 0
    %162 = vmatpush1.bf16.msra.mxu0 %v131
    %163 = vmatprep.subr.bf16.mxu0 0
    %164 = vmatpush2.bf16.msra.mxu0 0
    %165 = vmatprep.subr.bf16.mxu0 0
    %166 = vmatpush2.bf16.msra.mxu0 0
    %167 = vmatprep.subr.bf16.mxu0 0
    %168 = vmatpush2.bf16.msra.mxu0 0
    %169 = vmatprep.subr.bf16.mxu0 0
    %170 = vmatpush2.bf16.msra.mxu0 0
    %171 = vmatprep.subr.bf16.mxu0 0
    %172 = vmatpush2.bf16.msra.mxu0 0
    %173 = vmatprep.subr.bf16.mxu0 0
    %174 = vmatpush2.bf16.msra.mxu0 0
    %175 = vmatprep.subr.bf16.mxu0 0
    %176 = vmatpush2.bf16.msra.mxu0 0
    %177 = vmatprep.subr.bf16.mxu0 0
    %178 = vmatpush2.bf16.msra.mxu0 0
    %179 = vmatprep.mubr.bf16.mxu0 0
    %180 = vmatmul.mubr.bf16.gmra.mxu0 %v91
    %v181 = vpop.f32.mrf.mxu0
    %v182 = vadd.f32 %v73, %v181
    %v183 = vpop.f32.mrf.mxu0
    %v184 = vpop.f32.mrf.mxu0
    %v185 = vadd.f32 %v73, %v184
    %v186 = vpop.f32.mrf.mxu0
    %187 = vmatprep.mubr.bf16.mxu0 0
    %188 = vmatmul.mubr.bf16.gmra.mxu0 %v92
    %v189 = vpop.f32.mrf.mxu0
    %v190 = vadd.f32 %v73, %v189
    %v191 = vpop.f32.mrf.mxu0
    %v192 = vpop.f32.mrf.mxu0
    %v193 = vadd.f32 %v73, %v192
    %v194 = vpop.f32.mrf.mxu0
    %195 = vmatprep.mubr.bf16.mxu0 0
    %196 = vmatmul.mubr.bf16.gmra.mxu0 %v93
    %v197 = vpop.f32.mrf.mxu0
    %v198 = vadd.f32 %v73, %v197
    %v199 = vpop.f32.mrf.mxu0
    %v200 = vpop.f32.mrf.mxu0
    %v201 = vadd.f32 %v73, %v200
    %v202 = vpop.f32.mrf.mxu0
    %203 = vmatprep.mubr.bf16.mxu0 0
    %204 = vmatmul.mubr.bf16.gmra.mxu0 %v94
    %v205 = vpop.f32.mrf.mxu0
    %v206 = vadd.f32 %v73, %v205
    %v207 = vpop.f32.mrf.mxu0
    %v208 = vpop.f32.mrf.mxu0
    %v209 = vadd.f32 %v73, %v208
    %v210 = vpop.f32.mrf.mxu0
    %211 = vdwg.mxu0
    %212 = vst [vmem:[#allocation7] sm:$0xff] %v182
    %213 = vst [vmem:[#allocation7 + $0x8] sm:$0xff] %v185
    %214 = vst [vmem:[#allocation7 + $0x10] sm:$0xff] %v190
    %215 = vst [vmem:[#allocation7 + $0x18] sm:$0xff] %v193
    %216 = vst [vmem:[#allocation7 + $0x20] sm:$0xff] %v198
    %217 = vst [vmem:[#allocation7 + $0x28] sm:$0xff] %v201
    %218 = vst [vmem:[#allocation7 + $0x30] sm:$0xff] %v206
    %219 = vst [vmem:[#allocation7 + $0x38] sm:$0xff] %v209
    // Predicated region
    $region22: #{tpu_custom_call.1} parent=1 // pred_check
      _
    $region23: #{tpu_custom_call.1} parent=1 // pred_check_branch
      %221 = sbr.rel (0) target = $region25
    $region24: #{tpu_custom_call.1} parent=1 // pred_region
      %s223 = ssub.s32 1024, 1024
      %224 = vsyncadd [#allocation4], %s223
      %s225 = sshll.u32 [#allocation7], 4
      %s226 = int_to_ptr.vmem [resolvable:$true] %s225
      %231 = dma.vmem_to_hbm [thread:$0]  %s226, 1024, %s3, [#allocation4], 128, 128, 8
    $region25: #{tpu_custom_call.1} parent=1 // pred_fallthru
      _
    // Predicated region
    $region26: #{tpu_custom_call.1} parent=1 // pred_check
      _
    $region27: #{tpu_custom_call.1} parent=1 // pred_check_branch
      %233 = sbr.rel (0) target = $region29
    $region28: #{tpu_custom_call.1} parent=1 // pred_region
      %234 = dma.done [#allocation4], 1024
    $region29: #{tpu_custom_call.1} parent=1 // pred_fallthru
      _
    %235 = vsyncpa [#allocation3], 1
    %236 = vsyncpa [#allocation6], 1
    %237 = vsyncpa [#allocation4], 1

</llo_original>
